<compile_context>
chip_gen: v6e
topology: v6e:2x2x1
jax: 0.10.0
libtpu: 0.0.40
codegen_flags: <defaults>
</compile_context>

<pallas_src>
import functools

import jax
import jax.numpy as jnp
from jax import lax
from jax.experimental import pallas as pl
from jax.experimental.pallas import tpu as pltpu


def _conditioned_qf_kernel(x_ref, w1_ref, b1_ref, w2_ref, b2_ref, w3_ref, b3_ref,
                           out_ref):
    # Layer 1: [state|action] @ W1_sa + (z @ W1_z + b1)  (z-term pre-folded into bias)
    h = jnp.dot(x_ref[...], w1_ref[...], preferred_element_type=jnp.float32)
    h = jnp.maximum(h + b1_ref[...], 0.0).astype(jnp.bfloat16)

    # Layer 2
    h = jnp.dot(h, w2_ref[...], preferred_element_type=jnp.float32)
    h = jnp.maximum(h + b2_ref[...], 0.0).astype(jnp.bfloat16)

    # Scalar head, lane-dense: (1,H) x (TB,H)^T -> (1,TB)  (batch on the lane axis)
    q = lax.dot_general(w3_ref[...], h,
                        dimension_numbers=(((1,), (1,)), ((), ())),
                        preferred_element_type=jnp.float32)
    out_ref[...] = q + b3_ref[...]


@functools.partial(jax.jit, static_argnames=("block_b",))
def conditioned_qf_forward(state, action, z, params, *, block_b=1024):
    """state: (B,S) f32, action: (B,A) f32, z: (Z,) f32 -> Q: (B,) f32."""
    w1s, w1z, w1a, b1, w2, b2, w3, b3 = params
    B, S = state.shape
    A = action.shape[1]
    Z = w1z.shape[0]
    H = w2.shape[0]
    SA = S + A

    # Fold the fixed conditioning skill into the first-layer bias (exact; done once
    # per call, not once per tile):  concat([s, z, a]) @ W1 == [s|a] @ W1_sa + z @ W1_z.
    b1_eff = (z.reshape(1, -1).astype(jnp.float32) @ w1z + b1).astype(jnp.float32)

    # Fuse the state/action halves of the first layer; cast matmul operands to bf16.
    w1sa = jnp.concatenate([w1s, w1a], axis=0).astype(jnp.bfloat16)       # (S+A, H)
    x = jnp.concatenate([state, action], axis=-1).astype(jnp.bfloat16)    # (B, S+A)
    w2b = w2.astype(jnp.bfloat16)                                         # (H, H)
    w3row = w3.reshape(1, -1).astype(jnp.bfloat16)                        # (1, H)
    b2f = b2.astype(jnp.float32)
    b3f = b3.astype(jnp.float32)

    # Batch tiling (pad B up to a multiple of the tile if needed).
    TB = min(B, block_b)
    Bp = pl.cdiv(B, TB) * TB
    if Bp != B:
        x = jnp.pad(x, ((0, Bp - B), (0, 0)))
    grid = (Bp // TB,)

    flops = 2 * B * (SA + Z) * H + 2 * B * H * H + 2 * B * H
    bytes_accessed = (x.size * 2 + w1sa.size * 2 + w2b.size * 2 + w3row.size * 2
                      + (b1_eff.size + b2f.size + b3f.size) * 4 + Bp * 4)

    out = pl.pallas_call(
        _conditioned_qf_kernel,
        out_shape=jax.ShapeDtypeStruct((1, Bp), jnp.float32),
        grid=grid,
        in_specs=[
            pl.BlockSpec((TB, SA), lambda i: (i, 0)),   # per-tile activations
            pl.BlockSpec((SA, H), lambda i: (0, 0)),    # weights: VMEM-resident
            pl.BlockSpec((1, H), lambda i: (0, 0)),
            pl.BlockSpec((H, H), lambda i: (0, 0)),
            pl.BlockSpec((1, H), lambda i: (0, 0)),
            pl.BlockSpec((1, H), lambda i: (0, 0)),
            pl.BlockSpec((1, 1), lambda i: (0, 0)),
        ],
        out_specs=pl.BlockSpec((1, TB), lambda i: (0, i)),   # lane-dense Q row
        compiler_params=pltpu.CompilerParams(
            dimension_semantics=("parallel",)),
        cost_estimate=pl.CostEstimate(flops=flops, transcendentals=0,
                                      bytes_accessed=bytes_accessed),
    )(x, w1sa, b1_eff, w2b, b2f, w3row, b3f)

    return out[0, :B]                                     # squeeze(-1), matches MLPQF


def make_params(key, state_dim, z_dim, action_dim, hidden_dim):
    """Deterministic synthetic parameters for the inner qf MLP (f32, torch-layout)."""
    d_in = state_dim + z_dim + action_dim
    ks = jax.random.split(key, 6)
    w1 = jax.random.normal(ks[0], (d_in, hidden_dim), jnp.float32) * 0.1
    b1 = jax.random.normal(ks[1], (1, hidden_dim), jnp.float32) * 0.01
    w2 = jax.random.normal(ks[2], (hidden_dim, hidden_dim), jnp.float32) * 0.1
    b2 = jax.random.normal(ks[3], (1, hidden_dim), jnp.float32) * 0.01
    w3 = jax.random.normal(ks[4], (hidden_dim, 1), jnp.float32) * 0.1
    b3 = jax.random.normal(ks[5], (1, 1), jnp.float32) * 0.01
    # Split W1 rows to mirror concat([state, z, action]) ordering.
    w1s = w1[:state_dim]
    w1z = w1[state_dim:state_dim + z_dim]
    w1a = w1[state_dim + z_dim:]
    return (w1s, w1z, w1a, b1, w2, b2, w3, b3), (w1, b1, w2, b2, w3, b3)


def reference_forward(state, action, z, dense_params):
    """Pure-JAX f32 reference of ConditionedQF.forward (torch semantics)."""
    w1, b1, w2, b2, w3, b3 = dense_params
    batch_z = jnp.broadcast_to(z[None, :], (state.shape[0], z.shape[0]))
    x = jnp.concatenate([state, batch_z, action], axis=-1)
    h = jnp.maximum(x @ w1 + b1, 0.0)
    h = jnp.maximum(h @ w2 + b2, 0.0)
    return (h @ w3 + b3)[:, 0]


if __name__ == "__main__":
    S, Z, A, H = 10, 5, 4, 32
    key = jax.random.PRNGKey(0)
    k_state, k_action, k_z, k_params = jax.random.split(key, 4)
    z = jax.random.normal(k_z, (Z,), jnp.float32)           # fixed conditioning skill
    params, dense_params = make_params(k_params, S, Z, A, H)

    # Case 1: tiny batch (single tile).
    B = 8
    state = jax.random.normal(k_state, (B, S), jnp.float32)
    action = jax.random.normal(k_action, (B, A), jnp.float32)
    q = jax.block_until_ready(conditioned_qf_forward(state, action, z, params))
    q_ref = reference_forward(state, action, z, dense_params)
    assert q.shape == (B,)
    assert jnp.allclose(q, q_ref, atol=3e-2, rtol=3e-2), (q, q_ref)

    # Case 2: multi-tile grid with padding (exercises pipelined path).
    B2 = 200
    k_s2, k_a2 = jax.random.split(jax.random.PRNGKey(1), 2)
    state2 = jax.random.normal(k_s2, (B2, S), jnp.float32)
    action2 = jax.random.normal(k_a2, (B2, A), jnp.float32)
    q2 = jax.block_until_ready(
        conditioned_qf_forward(state2, action2, z, params, block_b=128))
    q2_ref = reference_forward(state2, action2, z, dense_params)
    assert q2.shape == (B2,)
    assert jnp.allclose(q2, q2_ref, atol=3e-2, rtol=3e-2), (q2, q2_ref)

    print("KERNEL_OK")
</pallas_src>

<mosaic_0001>
module attributes {stable_mosaic.version = 11 : i64} {
  func.func @_conditioned_qf_kernel(%arg0: i32, %arg1: memref<8x14xbf16, #tpu.memory_space<vmem>>, %arg2: memref<14x32xbf16, #tpu.memory_space<vmem>>, %arg3: memref<1x32xf32, #tpu.memory_space<vmem>>, %arg4: memref<32x32xbf16, #tpu.memory_space<vmem>>, %arg5: memref<1x32xf32, #tpu.memory_space<vmem>>, %arg6: memref<1x32xbf16, #tpu.memory_space<vmem>>, %arg7: memref<1x1xf32, #tpu.memory_space<vmem>>, %arg8: memref<1x8xf32, #tpu.memory_space<vmem>>) attributes {dimension_semantics = [#tpu.dimension_semantics<parallel>], iteration_bounds = array<i64: 1>, scalar_prefetch = 0 : i64, scratch_operands = 0 : i64, tpu.core_type = #tpu.core_type<tc>, window_params = [{transform_indices = @transform_0, window_bounds = array<i64: 8, 14>}, {pipeline_mode = #tpu.pipeline_mode<synchronous>, transform_indices = @transform_1, window_bounds = array<i64: 14, 32>}, {pipeline_mode = #tpu.pipeline_mode<synchronous>, transform_indices = @transform_2, window_bounds = array<i64: 1, 32>}, {pipeline_mode = #tpu.pipeline_mode<synchronous>, transform_indices = @transform_3, window_bounds = array<i64: 32, 32>}, {pipeline_mode = #tpu.pipeline_mode<synchronous>, transform_indices = @transform_4, window_bounds = array<i64: 1, 32>}, {pipeline_mode = #tpu.pipeline_mode<synchronous>, transform_indices = @transform_5, window_bounds = array<i64: 1, 32>}, {pipeline_mode = #tpu.pipeline_mode<synchronous>, transform_indices = @transform_6, window_bounds = array<i64: 1, 1>}, {transform_indices = @transform_7, window_bounds = array<i64: 1, 8>}]} {
    %c0 = arith.constant 0 : index
    %c0_0 = arith.constant 0 : index
    %0 = vector.load %arg1[%c0, %c0_0] : memref<8x14xbf16, #tpu.memory_space<vmem>>, vector<8x14xbf16>
    %c0_1 = arith.constant 0 : index
    %c0_2 = arith.constant 0 : index
    %1 = vector.load %arg2[%c0_1, %c0_2] : memref<14x32xbf16, #tpu.memory_space<vmem>>, vector<14x32xbf16>
    %cst = arith.constant dense<0.000000e+00> : vector<8x32xf32>
    %2 = tpu.matmul %0, %1, %cst {dimension_numbers = #tpu.dot_dimension_numbers<[1], [0], [0], [1], [0, 0, 1, 1], [], []>} : vector<8x14xbf16>, vector<14x32xbf16>, vector<8x32xf32> -> vector<8x32xf32>
    %c0_3 = arith.constant 0 : index
    %c0_4 = arith.constant 0 : index
    %3 = vector.load %arg3[%c0_3, %c0_4] : memref<1x32xf32, #tpu.memory_space<vmem>>, vector<1x32xf32>
    %4 = vector.broadcast %3 : vector<1x32xf32> to vector<8x32xf32>
    %5 = arith.addf %2, %4 : vector<8x32xf32>
    %cst_5 = arith.constant 0.000000e+00 : f32
    %6 = vector.broadcast %cst_5 : f32 to vector<8x32xf32>
    %7 = arith.maximumf %5, %6 : vector<8x32xf32>
    %8 = arith.truncf %7 : vector<8x32xf32> to vector<8x32xbf16>
    %c0_6 = arith.constant 0 : index
    %c0_7 = arith.constant 0 : index
    %9 = vector.load %arg4[%c0_6, %c0_7] : memref<32x32xbf16, #tpu.memory_space<vmem>>, vector<32x32xbf16>
    %cst_8 = arith.constant dense<0.000000e+00> : vector<8x32xf32>
    %10 = tpu.matmul %8, %9, %cst_8 {dimension_numbers = #tpu.dot_dimension_numbers<[1], [0], [0], [1], [0, 0, 1, 1], [], []>} : vector<8x32xbf16>, vector<32x32xbf16>, vector<8x32xf32> -> vector<8x32xf32>
    %c0_9 = arith.constant 0 : index
    %c0_10 = arith.constant 0 : index
    %11 = vector.load %arg5[%c0_9, %c0_10] : memref<1x32xf32, #tpu.memory_space<vmem>>, vector<1x32xf32>
    %12 = vector.broadcast %11 : vector<1x32xf32> to vector<8x32xf32>
    %13 = arith.addf %10, %12 : vector<8x32xf32>
    %cst_11 = arith.constant 0.000000e+00 : f32
    %14 = vector.broadcast %cst_11 : f32 to vector<8x32xf32>
    %15 = arith.maximumf %13, %14 : vector<8x32xf32>
    %16 = arith.truncf %15 : vector<8x32xf32> to vector<8x32xbf16>
    %c0_12 = arith.constant 0 : index
    %c0_13 = arith.constant 0 : index
    %17 = vector.load %arg6[%c0_12, %c0_13] : memref<1x32xbf16, #tpu.memory_space<vmem>>, vector<1x32xbf16>
    %cst_14 = arith.constant dense<0.000000e+00> : vector<1x8xf32>
    %18 = tpu.matmul %17, %16, %cst_14 {dimension_numbers = #tpu.dot_dimension_numbers<[1], [1], [0], [0], [0, 0, 1, 0], [], []>} : vector<1x32xbf16>, vector<8x32xbf16>, vector<1x8xf32> -> vector<1x8xf32>
    %c0_15 = arith.constant 0 : index
    %c0_16 = arith.constant 0 : index
    %19 = vector.load %arg7[%c0_15, %c0_16] : memref<1x1xf32, #tpu.memory_space<vmem>>, vector<1x1xf32>
    %20 = vector.broadcast %19 : vector<1x1xf32> to vector<1x8xf32>
    %21 = arith.addf %18, %20 : vector<1x8xf32>
    %c0_17 = arith.constant 0 : index
    %c0_18 = arith.constant 0 : index
    %22 = vector.load %arg8[%c0_17, %c0_18] : memref<1x8xf32, #tpu.memory_space<vmem>>, vector<1x8xf32>
    tpu.vector_store %arg8[%c0_17, %c0_18], %21 {strides = array<i32>} : memref<1x8xf32, #tpu.memory_space<vmem>>, vector<1x8xf32>,
    return
  }
  func.func @transform_0(%arg0: i32) -> (i32, i32) {
    %c0_i32 = arith.constant 0 : i32
    %c0_i32_0 = arith.constant 0 : i32
    return %arg0, %c0_i32 : i32, i32
  }
  func.func @transform_1(%arg0: i32) -> (i32, i32) {
    %c0_i32 = arith.constant 0 : i32
    %c0_i32_0 = arith.constant 0 : i32
    %c0_i32_1 = arith.constant 0 : i32
    return %c0_i32, %c0_i32_0 : i32, i32
  }
  func.func @transform_2(%arg0: i32) -> (i32, i32) {
    %c0_i32 = arith.constant 0 : i32
    %c0_i32_0 = arith.constant 0 : i32
    %c0_i32_1 = arith.constant 0 : i32
    return %c0_i32, %c0_i32_0 : i32, i32
  }
  func.func @transform_3(%arg0: i32) -> (i32, i32) {
    %c0_i32 = arith.constant 0 : i32
    %c0_i32_0 = arith.constant 0 : i32
    %c0_i32_1 = arith.constant 0 : i32
    return %c0_i32, %c0_i32_0 : i32, i32
  }
  func.func @transform_4(%arg0: i32) -> (i32, i32) {
    %c0_i32 = arith.constant 0 : i32
    %c0_i32_0 = arith.constant 0 : i32
    %c0_i32_1 = arith.constant 0 : i32
    return %c0_i32, %c0_i32_0 : i32, i32
  }
  func.func @transform_5(%arg0: i32) -> (i32, i32) {
    %c0_i32 = arith.constant 0 : i32
    %c0_i32_0 = arith.constant 0 : i32
    %c0_i32_1 = arith.constant 0 : i32
    return %c0_i32, %c0_i32_0 : i32, i32
  }
  func.func @transform_6(%arg0: i32) -> (i32, i32) {
    %c0_i32 = arith.constant 0 : i32
    %c0_i32_0 = arith.constant 0 : i32
    %c0_i32_1 = arith.constant 0 : i32
    return %c0_i32, %c0_i32_0 : i32, i32
  }
  func.func @transform_7(%arg0: i32) -> (i32, i32) {
    %c0_i32 = arith.constant 0 : i32
    %c0_i32_0 = arith.constant 0 : i32
    return %c0_i32, %arg0 : i32, i32
  }
}

</mosaic_0001>

<llo_original>
// kernel: conditioned_qf_forward.1
$region0: #{conditioned_qf_forward.1}
  #allocation0 [shape = 'u32[]', space=smem, size = 0x4, offset = 0x4, fixed_abs, tag = 'smem constant byte address 0x4 - core index']
  #allocation1 [shape = 'u32[144,128]{1,0:T(1,128)}', space=vmem, size = 0x12000, scoped, tag = 'internal scratch']
  #allocation2 [shape = 'f32[1,1]{1,0:T(1,128)S(1)}', space=vmem, size = 0x200, scoped, tag = 'scoped memory for conditioned_qf_forward.1']
  %s0 = inlined_call_operand.vmem [shape: bf16[8,14], index: 0, kind: input, shape index: {}]
  %s1 = inlined_call_operand.vmem [shape: bf16[14,32], index: 1, kind: input, shape index: {}]
  %s2 = inlined_call_operand.vmem [shape: f32[1,32], index: 2, kind: input, shape index: {}]
  %s3 = inlined_call_operand.vmem [shape: bf16[32,32], index: 3, kind: input, shape index: {}]
  %s4 = inlined_call_operand.vmem [shape: f32[1,32], index: 4, kind: input, shape index: {}]
  %s5 = inlined_call_operand.vmem [shape: bf16[1,32], index: 5, kind: input, shape index: {}]
  %s6 = inlined_call_operand.<no memory space> [shape: f32[1,1], index: 6, kind: input, shape index: {}]
  %s7 = inlined_call_operand.hbm [shape: f32[1,8], index: 7, kind: output, shape index: {}]
  %s8 = sld [smem:[#allocation0]]
  $region38: #{conditioned_qf_forward.1} parent=0
    _
  %s10 = ssub.s32 1, %s8
  %s11 = scalar_select 0, %s10, %s8
  %v12 = vstv %s6
  %13 = vst [vmem:[#allocation2] sm:$0x1] %v12
  $region1: #{conditioned_qf_forward.1} parent=0
    #allocation3 [shape = 'u8[512]{0}', space=vmem, size = 0x400, scoped, tag = 'output window, operand 0, single buffered']
    #allocation4 [shape = 's32[1]{0}', space=sflag, size = 0x4, scoped, tag = 'scoped memory for conditioned_qf_forward.1']
    %14 = vsyncpa [#allocation4], 0
    // Predicated region
    $region2: #{conditioned_qf_forward.1} parent=1 // pred_check
      _
    $region3: #{conditioned_qf_forward.1} parent=1 // pred_check_branch
      %16 = sbr.rel (0) target = $region5
    $region4: #{conditioned_qf_forward.1} parent=1 // pred_region
      _
    $region5: #{conditioned_qf_forward.1} parent=1 // pred_fallthru
      _
    // Predicated region
    $region6: #{conditioned_qf_forward.1} parent=1 // pred_check
      _
    $region7: #{conditioned_qf_forward.1} parent=1 // pred_check_branch
      %18 = sbr.rel (0) target = $region9
    $region8: #{conditioned_qf_forward.1} parent=1 // pred_region
      _
    $region9: #{conditioned_qf_forward.1} parent=1 // pred_fallthru
      _
    // Predicated region
    $region10: #{conditioned_qf_forward.1} parent=1 // pred_check
      _
    $region11: #{conditioned_qf_forward.1} parent=1 // pred_check_branch
      %20 = sbr.rel (0) target = $region13
    $region12: #{conditioned_qf_forward.1} parent=1 // pred_region
      _
    $region13: #{conditioned_qf_forward.1} parent=1 // pred_fallthru
      _
    // Predicated region
    $region14: #{conditioned_qf_forward.1} parent=1 // pred_check
      _
    $region15: #{conditioned_qf_forward.1} parent=1 // pred_check_branch
      %22 = sbr.rel (0) target = $region17
    $region16: #{conditioned_qf_forward.1} parent=1 // pred_region
      _
    $region17: #{conditioned_qf_forward.1} parent=1 // pred_fallthru
      _
    // Predicated region
    $region18: #{conditioned_qf_forward.1} parent=1 // pred_check
      _
    $region19: #{conditioned_qf_forward.1} parent=1 // pred_check_branch
      %24 = sbr.rel (0) target = $region21
    $region20: #{conditioned_qf_forward.1} parent=1 // pred_region
      _
    $region21: #{conditioned_qf_forward.1} parent=1 // pred_fallthru
      _
    // Predicated region
    $region22: #{conditioned_qf_forward.1} parent=1 // pred_check
      _
    $region23: #{conditioned_qf_forward.1} parent=1 // pred_check_branch
      %26 = sbr.rel (0) target = $region25
    $region24: #{conditioned_qf_forward.1} parent=1 // pred_region
      _
    $region25: #{conditioned_qf_forward.1} parent=1 // pred_fallthru
      _
    // Predicated region
    $region26: #{conditioned_qf_forward.1} parent=1 // pred_check
      _
    $region27: #{conditioned_qf_forward.1} parent=1 // pred_check_branch
      %28 = sbr.rel (0) target = $region29
    $region28: #{conditioned_qf_forward.1} parent=1 // pred_region
      _
    $region29: #{conditioned_qf_forward.1} parent=1 // pred_fallthru
      _
    %v30 = vld [vmem:[%s0] sm:$0xf]
    %v31 = vld [vmem:[%s1] sm:$0xf]
    %v32 = vld [vmem:[%s1 + $0x4] sm:$0x7]
    %v33 = vld [vmem:[%s2] sm:$0x1]
    %v35 = vlaneseq
    %v36 = vshrl.u32 %v35, 7
    %v37 = vsub.s32 0, %v36
    %v38 = vrot.slane %v33, %v37
    %v42 = vunpack.c.l.b16 %v31
    %v43 = vunpack.c.l.b16 %v32
    %v44 = vpack.c.b16 %v43, %v42
    %vm45 = vcmask 113664
    %v47 = vsel %vm45, %v30, 0
    %vm49 = vcmask 1046528
    %v51 = vsel %vm49, %v44, 0
    %53 = vmatprep.subr.bf16.mxu0 0
    %54 = vmatpush1.bf16.msra.mxu0 0
    %55 = vmatprep.subr.bf16.mxu0 0
    %56 = vmatpush1.bf16.msra.mxu0 0
    %57 = vmatprep.subr.bf16.mxu0 0
    %58 = vmatpush1.bf16.msra.mxu0 0
    %59 = vmatprep.subr.bf16.mxu0 0
    %60 = vmatpush1.bf16.msra.mxu0 0
    %61 = vmatprep.subr.bf16.mxu0 0
    %62 = vmatpush1.bf16.msra.mxu0 0
    %63 = vmatprep.subr.bf16.mxu0 0
    %64 = vmatpush1.bf16.msra.mxu0 0
    %65 = vmatprep.subr.bf16.mxu0 0
    %66 = vmatpush1.bf16.msra.mxu0 0
    %67 = vmatprep.subr.bf16.mxu0 0
    %68 = vmatpush1.bf16.msra.mxu0 %v51
    %69 = vmatprep.subr.bf16.mxu0 0
    %70 = vmatpush2.bf16.msra.mxu0 0
    %71 = vmatprep.subr.bf16.mxu0 0
    %72 = vmatpush2.bf16.msra.mxu0 0
    %73 = vmatprep.subr.bf16.mxu0 0
    %74 = vmatpush2.bf16.msra.mxu0 0
    %75 = vmatprep.subr.bf16.mxu0 0
    %76 = vmatpush2.bf16.msra.mxu0 0
    %77 = vmatprep.subr.bf16.mxu0 0
    %78 = vmatpush2.bf16.msra.mxu0 0
    %79 = vmatprep.subr.bf16.mxu0 0
    %80 = vmatpush2.bf16.msra.mxu0 0
    %81 = vmatprep.subr.bf16.mxu0 0
    %82 = vmatpush2.bf16.msra.mxu0 0
    %83 = vmatprep.subr.bf16.mxu0 0
    %84 = vmatpush2.bf16.msra.mxu0 0
    %85 = vmatprep.mubr.bf16.mxu0 0
    %86 = vmatmul.mubr.bf16.gmra.mxu0 %v47
    %v87 = vpop.f32.mrf.mxu0
    %v88 = vadd.f32 %v38, %v87
    %v89 = vpop.f32.mrf.mxu0
    %v90 = vpop.f32.mrf.mxu0
    %v91 = vpop.f32.mrf.mxu0
    %92 = vdwg.mxu0
    %v93 = vmax.f32 %v88, 0.0
    %v94 = vpack.c.bf16 %v93, %v93
    %v95 = vld [vmem:[%s3] sm:$0xf]
    %v96 = vld [vmem:[%s3 + $0x4] sm:$0xf]
    %v97 = vld [vmem:[%s3 + $0x8] sm:$0xf]
    %v98 = vld [vmem:[%s3 + $0xc] sm:$0xf]
    %v99 = vld [vmem:[%s4] sm:$0x1]
    %v101 = vlaneseq
    %v102 = vshrl.u32 %v101, 7
    %v103 = vsub.s32 0, %v102
    %v104 = vrot.slane %v99, %v103
    %v110 = vunpack.c.l.b16 %v95
    %v111 = vunpack.c.l.b16 %v96
    %v112 = vunpack.c.l.b16 %v97
    %v113 = vunpack.c.l.b16 %v98
    %v114 = vpack.c.b16 %v111, %v110
    %v115 = vpack.c.b16 %v113, %v112
    %vm118 = vcmask 261120
    %v120 = vsel %vm118, %v94, 0
    %122 = vmatprep.subr.bf16.mxu0 0
    %123 = vmatpush1.bf16.msra.mxu0 0
    %124 = vmatprep.subr.bf16.mxu0 0
    %125 = vmatpush1.bf16.msra.mxu0 0
    %126 = vmatprep.subr.bf16.mxu0 0
    %127 = vmatpush1.bf16.msra.mxu0 0
    %128 = vmatprep.subr.bf16.mxu0 0
    %129 = vmatpush1.bf16.msra.mxu0 0
    %130 = vmatprep.subr.bf16.mxu0 0
    %131 = vmatpush1.bf16.msra.mxu0 0
    %132 = vmatprep.subr.bf16.mxu0 0
    %133 = vmatpush1.bf16.msra.mxu0 0
    %134 = vmatprep.subr.bf16.mxu0 0
    %135 = vmatpush1.bf16.msra.mxu0 %v115
    %136 = vmatprep.subr.bf16.mxu0 0
    %137 = vmatpush1.bf16.msra.mxu0 %v114
    %138 = vmatprep.subr.bf16.mxu0 0
    %139 = vmatpush2.bf16.msra.mxu0 0
    %140 = vmatprep.subr.bf16.mxu0 0
    %141 = vmatpush2.bf16.msra.mxu0 0
    %142 = vmatprep.subr.bf16.mxu0 0
    %143 = vmatpush2.bf16.msra.mxu0 0
    %144 = vmatprep.subr.bf16.mxu0 0
    %145 = vmatpush2.bf16.msra.mxu0 0
    %146 = vmatprep.subr.bf16.mxu0 0
    %147 = vmatpush2.bf16.msra.mxu0 0
    %148 = vmatprep.subr.bf16.mxu0 0
    %149 = vmatpush2.bf16.msra.mxu0 0
    %150 = vmatprep.subr.bf16.mxu0 0
    %151 = vmatpush2.bf16.msra.mxu0 0
    %152 = vmatprep.subr.bf16.mxu0 0
    %153 = vmatpush2.bf16.msra.mxu0 0
    %154 = vmatprep.mubr.bf16.mxu0 0
    %155 = vmatmul.mubr.bf16.gmra.mxu0 %v120
    %v156 = vpop.f32.mrf.mxu0
    %v157 = vadd.f32 %v104, %v156
    %v158 = vpop.f32.mrf.mxu0
    %v159 = vpop.f32.mrf.mxu0
    %v160 = vpop.f32.mrf.mxu0
    %161 = vdwg.mxu0
    %v162 = vmax.f32 %v157, 0.0
    %v163 = vpack.c.bf16 %v162, %v162
    %v164 = vld [vmem:[%s5] sm:$0x1]
    %v165 = vld [vmem:[#allocation2] sm:$0x1]
    %167 = vset.pattern.permute.xlu0 0
    %168 = vperm.xlu0 %167, %v165
    %v169 = vpop.permute.xlu0 %168
    %v171 = vlaneseq
    %v172 = vshrl.u32 %v171, 7
    %v173 = vsub.s32 0, %v172
    %v174 = vrot.slane %v169, %v173
    %v176 = vsel %vm118, %v164, 0
    %v179 = vsel %vm118, %v163, 0
    %181 = vmatprep.subr.bf16.mxu0 0
    %182 = vmatpush1.bf16.xpose.msra.mxu0 0
    %183 = vmatprep.subr.bf16.mxu0 0
    %184 = vmatpush1.bf16.xpose.msra.mxu0 0
    %185 = vmatprep.subr.bf16.mxu0 0
    %186 = vmatpush1.bf16.xpose.msra.mxu0 0
    %187 = vmatprep.subr.bf16.mxu0 0
    %188 = vmatpush1.bf16.xpose.msra.mxu0 0
    %189 = vmatprep.subr.bf16.mxu0 0
    %190 = vmatpush1.bf16.xpose.msra.mxu0 0
    %191 = vmatprep.subr.bf16.mxu0 0
    %192 = vmatpush1.bf16.xpose.msra.mxu0 0
    %193 = vmatprep.subr.bf16.mxu0 0
    %194 = vmatpush1.bf16.xpose.msra.mxu0 0
    %195 = vmatprep.subr.bf16.mxu0 0
    %196 = vmatpush1.bf16.xpose.msra.mxu0 %v179
    %197 = vmatprep.subr.bf16.mxu0 0
    %198 = vmatpush2.bf16.xpose.msra.mxu0 0
    %199 = vmatprep.subr.bf16.mxu0 0
    %200 = vmatpush2.bf16.xpose.msra.mxu0 0
    %201 = vmatprep.subr.bf16.mxu0 0
    %202 = vmatpush2.bf16.xpose.msra.mxu0 0
    %203 = vmatprep.subr.bf16.mxu0 0
    %204 = vmatpush2.bf16.xpose.msra.mxu0 0
    %205 = vmatprep.subr.bf16.mxu0 0
    %206 = vmatpush2.bf16.xpose.msra.mxu0 0
    %207 = vmatprep.subr.bf16.mxu0 0
    %208 = vmatpush2.bf16.xpose.msra.mxu0 0
    %209 = vmatprep.subr.bf16.mxu0 0
    %210 = vmatpush2.bf16.xpose.msra.mxu0 0
    %211 = vmatprep.subr.bf16.mxu0 0
    %212 = vmatpush2.bf16.xpose.msra.mxu0 0
    %213 = vmatprep.mubr.bf16.mxu0 0
    %214 = vmatmul.mubr.bf16.gmra.mxu0 %v176
    %v215 = vpop.f32.mrf.mxu0
    %v216 = vadd.f32 %v174, %v215
    %v217 = vpop.f32.mrf.mxu0
    %v218 = vpop.f32.mrf.mxu0
    %v219 = vpop.f32.mrf.mxu0
    %220 = vdwg.mxu0
    %vm221 = vcmask 57344
    %222 = vst.msk [vmem:[#allocation3] sm:$0x1] %vm221, %v216
    // Predicated region
    $region30: #{conditioned_qf_forward.1} parent=1 // pred_check
      _
    $region31: #{conditioned_qf_forward.1} parent=1 // pred_check_branch
      %224 = sbr.rel (0) target = $region33
    $region32: #{conditioned_qf_forward.1} parent=1 // pred_region
      %s226 = ssub.s32 16, 16
      %227 = vsyncadd [#allocation4], %s226
      %s229 = sshll.u32 [#allocation3], 4
      %s230 = int_to_ptr.vmem [resolvable:$true] %s229
      %232 = dma.vmem_to_hbm [thread:$0]  %s230, 16, %s7, [#allocation4]
    $region33: #{conditioned_qf_forward.1} parent=1 // pred_fallthru
      _
    // Predicated region
    $region34: #{conditioned_qf_forward.1} parent=1 // pred_check
      _
    $region35: #{conditioned_qf_forward.1} parent=1 // pred_check_branch
      %234 = sbr.rel (0) target = $region37
    $region36: #{conditioned_qf_forward.1} parent=1 // pred_region
      %235 = dma.done [#allocation4], 16
    $region37: #{conditioned_qf_forward.1} parent=1 // pred_fallthru
      _
    %236 = vsyncpa [#allocation4], 1

</llo_original>
